<compile_context>
chip_gen: v6e
topology: v6e:2x2x1
jax: 0.10.0
libtpu: 0.0.40
codegen_flags: <defaults>
</compile_context>

<pallas_src>
import functools
import math

import jax
import jax.numpy as jnp
from jax.experimental import pallas as pl
from jax.experimental.pallas import tpu as pltpu

_LANES = 128
_SUBLANES = 8


def _qfl_partial_kernel(pred_ref, target_ref, out_ref, *, beta, valid_last,
                        needs_mask):
    """Elementwise QFL on one (TN, 128) tile + partial reduce to (SUB, 128)."""
    x = pred_ref[...].astype(jnp.float32)          # student logits
    y = target_ref[...].astype(jnp.float32)        # teacher logits

    # Single-transcendental sigmoid (one EUP tanh each), reused for both the
    # BCE log term and the focal-weight difference.
    s = 0.5 * (1.0 + jnp.tanh(0.5 * x))            # sigmoid(pred)
    t = 0.5 * (1.0 + jnp.tanh(0.5 * y))            # sigmoid(target)

    # Stable BCE-with-logits, reusing s:
    #   bce = max(x,0) - x*t + log1p(exp(-|x|)) = max(x,0) - x*t - log(sigmoid(|x|))
    #   with sigmoid(|x|) = where(x >= 0, s, 1 - s)  (argument is in [0.5, 1]).
    bce = jnp.maximum(x, 0.0) - x * t - jnp.log(jnp.where(x >= 0.0, s, 1.0 - s))

    diff = jnp.abs(s - t)
    if beta == 1.0:
        fw = diff
    elif beta == 2.0:
        fw = diff * diff
    else:
        # Guard diff==0 (padded elements) for arbitrary beta: x**b -> exp(b*log(x)).
        fw = jnp.where(diff > 0.0, jnp.power(diff, beta), 0.0)

    loss = bce * fw
    tn = loss.shape[0]

    def _partial_sum(l):
        if tn % _SUBLANES == 0:
            # Pure vreg adds, no cross-lane work: (TN,128) -> (8,128).
            return jnp.sum(l.reshape(tn // _SUBLANES, _SUBLANES, _LANES), axis=0)
        # Tiny single-tile case (tn == rows < 8): out block is (1, tn, 128).
        return l

    if needs_mask:
        last = pl.num_programs(0) - 1

        @pl.when(pl.program_id(0) == last)
        def _():
            # Only the ragged last tile pays for the row mask.
            row_ids = jax.lax.broadcasted_iota(jnp.int32, loss.shape, 0)
            out_ref[0] = _partial_sum(jnp.where(row_ids < valid_last, loss, 0.0))

        @pl.when(pl.program_id(0) != last)
        def _():
            out_ref[0] = _partial_sum(loss)
    else:
        out_ref[0] = _partial_sum(loss)


def kd_quality_focal_loss_pallas(pred, target, *, beta=1.0, loss_weight=1.0,
                                 reduction="mean", weight=None, avg_factor=None,
                                 tile_rows=8192):
    """Pallas implementation of KDQualityFocalLoss.forward.

    pred/target: logits of identical shape (any dtype; streamed natively and
    cast to f32 inside the kernel).
    """
    assert pred.shape == target.shape
    if weight is not None:
        # TODO(synk): per-sample `weight` (broadcast over classes) not
        # implemented in this Pallas path.
        raise NotImplementedError("weight is not supported")
    if reduction not in ("mean", "sum"):
        # TODO(synk): reduction='none' (elementwise loss output) not implemented.
        raise NotImplementedError("only 'mean'/'sum' reductions implemented")

    total = math.prod(pred.shape)

    # Lane-dense layout: view the problem as (rows, 128) in the NATIVE dtype.
    pf = pred.reshape(-1)
    tf = target.reshape(-1)
    pad = (-total) % _LANES
    if pad:
        # TODO(synk): this fallback costs one extra read+write pass over the
        # inputs; it is only hit when the flattened size is not a multiple of
        # 128. Zero-padding BOTH pred and target is exact: the focal weight
        # |sigmoid(0) - sigmoid(0)|**beta == 0 there.
        pf = jnp.pad(pf, (0, pad))
        tf = jnp.pad(tf, (0, pad))
    rows = (total + pad) // _LANES
    pf = pf.reshape(rows, _LANES)
    tf = tf.reshape(rows, _LANES)

    # Tile selection: multiple of 8 rows, large enough to amortize per-step
    # overhead, but capped at ceil(rows/2) so the parallel grid has >= 2 steps
    # for megacore (v7x). For tiny inputs (rows <= 8) use the whole array.
    if rows <= _SUBLANES:
        tn = rows
    else:
        tn_req = (max(int(tile_rows), _SUBLANES) // _SUBLANES) * _SUBLANES
        half = pl.cdiv(pl.cdiv(rows, 2), _SUBLANES) * _SUBLANES
        tn = min(tn_req, half)

    num_tiles = pl.cdiv(rows, tn)
    needs_mask = (rows % tn) != 0
    valid_last = rows - (num_tiles - 1) * tn
    sub = _SUBLANES if tn % _SUBLANES == 0 else tn

    kernel = functools.partial(_qfl_partial_kernel, beta=float(beta),
                               valid_last=int(valid_last),
                               needs_mask=bool(needs_mask))

    partials = pl.pallas_call(
        kernel,
        out_shape=jax.ShapeDtypeStruct((num_tiles, sub, _LANES), jnp.float32),
        grid=(num_tiles,),
        in_specs=[
            pl.BlockSpec((tn, _LANES), lambda i: (i, 0)),
            pl.BlockSpec((tn, _LANES), lambda i: (i, 0)),
        ],
        out_specs=pl.BlockSpec((1, sub, _LANES), lambda i: (i, 0, 0)),
        compiler_params=pltpu.CompilerParams(
            dimension_semantics=("parallel",),
            vmem_limit_bytes=32 * 1024 * 1024,
        ),
    )(pf, tf)

    total_sum = jnp.sum(partials)
    if avg_factor is not None:
        if reduction != "mean":
            raise ValueError('avg_factor can not be used with reduction="sum"')
        red = total_sum / (jnp.float32(avg_factor) + jnp.finfo(jnp.float32).eps)
    elif reduction == "mean":
        red = total_sum / jnp.float32(total)
    else:  # "sum"
        red = total_sum
    return jnp.float32(loss_weight) * red


def _reference(pred, target, beta=1.0, loss_weight=1.0):
    # Pure-JAX reference (matches PyTorch BCEWithLogits stable formulation).
    pred = pred.astype(jnp.float32)
    target = target.astype(jnp.float32)
    t = jax.nn.sigmoid(target)
    bce = jnp.maximum(pred, 0.0) - pred * t + jnp.log1p(jnp.exp(-jnp.abs(pred)))
    fw = jnp.abs(jax.nn.sigmoid(pred) - t) ** beta
    return loss_weight * jnp.mean(bce * fw)


if __name__ == "__main__":
    key = jax.random.PRNGKey(0)
    k1, k2, k3, k4, k5, k6, k7, k8 = jax.random.split(key, 8)

    # 1) Shape consistent with the module: pred/target are (N, C) logits.
    #    total = 256 (multiple of 128) -> no-pad fast path, single tile.
    N, C = 8, 32
    pred = jax.random.normal(k1, (N, C), dtype=jnp.float32) * 2.0
    target = jax.random.normal(k2, (N, C), dtype=jnp.float32) * 2.0
    out = jax.block_until_ready(
        kd_quality_focal_loss_pallas(pred, target, beta=1.0, loss_weight=1.0))
    ref = _reference(pred, target)
    assert jnp.allclose(out, ref, rtol=1e-5, atol=1e-5), (out, ref)

    # 2) Ragged-last-tile path (rows=10, tn=8, only last tile is masked).
    N2, C2 = 10, 128
    pred2 = jax.random.normal(k3, (N2, C2), dtype=jnp.float32) * 2.0
    target2 = jax.random.normal(k4, (N2, C2), dtype=jnp.float32) * 2.0
    out2 = jax.block_until_ready(
        kd_quality_focal_loss_pallas(pred2, target2, tile_rows=8))
    ref2 = _reference(pred2, target2)
    assert jnp.allclose(out2, ref2, rtol=1e-5, atol=1e-5), (out2, ref2)

    # 3) Native bf16 streaming (no wrapper upcast).
    N3, C3 = 16, 64
    pred3 = (jax.random.normal(k5, (N3, C3), dtype=jnp.float32) * 2.0
             ).astype(jnp.bfloat16)
    target3 = (jax.random.normal(k6, (N3, C3), dtype=jnp.float32) * 2.0
               ).astype(jnp.bfloat16)
    out3 = jax.block_until_ready(kd_quality_focal_loss_pallas(pred3, target3))
    ref3 = _reference(pred3, target3)
    assert jnp.allclose(out3, ref3, rtol=1e-4, atol=1e-4), (out3, ref3)

    # 4) Flattened size not a multiple of 128 -> pad fallback path.
    N4, C4 = 6, 20
    pred4 = jax.random.normal(k7, (N4, C4), dtype=jnp.float32) * 2.0
    target4 = jax.random.normal(k8, (N4, C4), dtype=jnp.float32) * 2.0
    out4 = jax.block_until_ready(
        kd_quality_focal_loss_pallas(pred4, target4, beta=2.0, loss_weight=0.5))
    ref4 = _reference(pred4, target4, beta=2.0, loss_weight=0.5)
    assert jnp.allclose(out4, ref4, rtol=1e-5, atol=1e-5), (out4, ref4)

    print("KERNEL_OK")
</pallas_src>

<mosaic_0001>
module attributes {stable_mosaic.version = 11 : i64} {
  func.func @_qfl_partial_kernel(%arg0: i32, %arg1: memref<2x128xf32, #tpu.memory_space<vmem>>, %arg2: memref<2x128xf32, #tpu.memory_space<vmem>>, %arg3: memref<1x2x128xf32, #tpu.memory_space<vmem>>) attributes {dimension_semantics = [#tpu.dimension_semantics<parallel>], iteration_bounds = array<i64: 1>, scalar_prefetch = 0 : i64, scratch_operands = 0 : i64, tpu.core_type = #tpu.core_type<tc>, window_params = [{transform_indices = @transform_0, window_bounds = array<i64: 2, 128>}, {transform_indices = @transform_1, window_bounds = array<i64: 2, 128>}, {transform_indices = @transform_2, window_bounds = array<i64: 1, 2, 128>}]} {
    %c0 = arith.constant 0 : index
    %c0_0 = arith.constant 0 : index
    %0 = vector.load %arg1[%c0, %c0_0] : memref<2x128xf32, #tpu.memory_space<vmem>>, vector<2x128xf32>
    %c0_1 = arith.constant 0 : index
    %c0_2 = arith.constant 0 : index
    %1 = vector.load %arg2[%c0_1, %c0_2] : memref<2x128xf32, #tpu.memory_space<vmem>>, vector<2x128xf32>
    %cst = arith.constant 5.000000e-01 : f32
    %2 = vector.broadcast %cst : f32 to vector<2x128xf32>
    %3 = arith.mulf %2, %0 : vector<2x128xf32>
    %4 = math.tanh %3 : vector<2x128xf32>
    %cst_3 = arith.constant 1.000000e+00 : f32
    %5 = vector.broadcast %cst_3 : f32 to vector<2x128xf32>
    %6 = arith.addf %5, %4 : vector<2x128xf32>
    %cst_4 = arith.constant 5.000000e-01 : f32
    %7 = vector.broadcast %cst_4 : f32 to vector<2x128xf32>
    %8 = arith.mulf %7, %6 : vector<2x128xf32>
    %cst_5 = arith.constant 5.000000e-01 : f32
    %9 = vector.broadcast %cst_5 : f32 to vector<2x128xf32>
    %10 = arith.mulf %9, %1 : vector<2x128xf32>
    %11 = math.tanh %10 : vector<2x128xf32>
    %cst_6 = arith.constant 1.000000e+00 : f32
    %12 = vector.broadcast %cst_6 : f32 to vector<2x128xf32>
    %13 = arith.addf %12, %11 : vector<2x128xf32>
    %cst_7 = arith.constant 5.000000e-01 : f32
    %14 = vector.broadcast %cst_7 : f32 to vector<2x128xf32>
    %15 = arith.mulf %14, %13 : vector<2x128xf32>
    %cst_8 = arith.constant 0.000000e+00 : f32
    %16 = vector.broadcast %cst_8 : f32 to vector<2x128xf32>
    %17 = arith.maximumf %0, %16 : vector<2x128xf32>
    %18 = arith.mulf %0, %15 : vector<2x128xf32>
    %19 = arith.subf %17, %18 : vector<2x128xf32>
    %cst_9 = arith.constant 0.000000e+00 : f32
    %20 = vector.broadcast %cst_9 : f32 to vector<2x128xf32>
    %21 = arith.cmpf oge, %0, %20 : vector<2x128xf32>
    %cst_10 = arith.constant 1.000000e+00 : f32
    %22 = vector.broadcast %cst_10 : f32 to vector<2x128xf32>
    %23 = arith.subf %22, %8 : vector<2x128xf32>
    %24 = arith.select %21, %8, %23 : vector<2x128xi1>, vector<2x128xf32>
    %25 = math.log %24 : vector<2x128xf32>
    %26 = arith.subf %19, %25 : vector<2x128xf32>
    %27 = arith.subf %8, %15 : vector<2x128xf32>
    %28 = math.absf %27 : vector<2x128xf32>
    %29 = arith.mulf %26, %28 : vector<2x128xf32>
    %c0_11 = arith.constant 0 : index
    %c0_12 = arith.constant 0 : index
    %c0_13 = arith.constant 0 : index
    %30 = vector.load %arg3[%c0_11, %c0_12, %c0_13] : memref<1x2x128xf32, #tpu.memory_space<vmem>>, vector<1x2x128xf32>
    %31 = vector.shape_cast %30 : vector<1x2x128xf32> to vector<2x128xf32>
    %32 = vector.shape_cast %29 : vector<2x128xf32> to vector<1x2x128xf32>
    tpu.vector_store %arg3[%c0_11, %c0_12, %c0_13], %32 {strides = array<i32>} : memref<1x2x128xf32, #tpu.memory_space<vmem>>, vector<1x2x128xf32>,
    return
  }
  func.func @transform_0(%arg0: i32) -> (i32, i32) {
    %c0_i32 = arith.constant 0 : i32
    %c0_i32_0 = arith.constant 0 : i32
    return %arg0, %c0_i32 : i32, i32
  }
  func.func @transform_1(%arg0: i32) -> (i32, i32) {
    %c0_i32 = arith.constant 0 : i32
    %c0_i32_0 = arith.constant 0 : i32
    return %arg0, %c0_i32 : i32, i32
  }
  func.func @transform_2(%arg0: i32) -> (i32, i32, i32) {
    %c0_i32 = arith.constant 0 : i32
    %c0_i32_0 = arith.constant 0 : i32
    %c0_i32_1 = arith.constant 0 : i32
    return %arg0, %c0_i32, %c0_i32_0 : i32, i32, i32
  }
}

</mosaic_0001>

<llo_original>
// kernel: tpu_custom_call.1
$region0: #{tpu_custom_call.1}
  #allocation0 [shape = 'u32[]', space=smem, size = 0x4, offset = 0x4, fixed_abs, tag = 'smem constant byte address 0x4 - core index']
  #allocation1 [shape = 'u32[144,128]{1,0:T(1,128)}', space=vmem, size = 0x12000, scoped, tag = 'internal scratch']
  %s0 = inlined_call_operand.hbm [shape: f32[2,128], index: 0, kind: input, shape index: {}]
  %s1 = inlined_call_operand.hbm [shape: f32[2,128], index: 1, kind: input, shape index: {}]
  %s2 = inlined_call_operand.hbm [shape: f32[1,2,128], index: 2, kind: output, shape index: {}]
  %s3 = sld [smem:[#allocation0]]
  $region26: #{tpu_custom_call.1} parent=0
    _
  %s5 = ssub.s32 1, %s3
  %s6 = scalar_select 0, %s5, %s3
  $region1: #{tpu_custom_call.1} parent=0
    #allocation2 [shape = 'u8[1024]{0}', space=vmem, size = 0x400, scoped, tag = 'input window, operand 0, single buffered']
    #allocation3 [shape = 's32[1]{0}', space=sflag, size = 0x4, scoped, tag = 'scoped memory for tpu_custom_call.1']
    #allocation4 [shape = 's32[1]{0}', space=sflag, size = 0x4, scoped, tag = 'scoped memory for tpu_custom_call.1']
    #allocation5 [shape = 'u8[1024]{0}', space=vmem, size = 0x400, scoped, tag = 'input window, operand 1, single buffered']
    #allocation6 [shape = 's32[1]{0}', space=sflag, size = 0x4, scoped, tag = 'scoped memory for tpu_custom_call.1']
    #allocation7 [shape = 'u8[1024]{0}', space=vmem, size = 0x400, scoped, tag = 'output window, operand 0, single buffered']
    %7 = vsyncpa [#allocation3], 0
    %8 = vsyncpa [#allocation6], 0
    %9 = vsyncpa [#allocation4], 0
    // Predicated region
    $region2: #{tpu_custom_call.1} parent=1 // pred_check
      _
    $region3: #{tpu_custom_call.1} parent=1 // pred_check_branch
      %11 = sbr.rel (0) target = $region5
    $region4: #{tpu_custom_call.1} parent=1 // pred_region
      %s13 = ssub.s32 32, 32
      %14 = vsyncadd [#allocation3], %s13
      %s16 = sshll.u32 [#allocation2], 4
      %s17 = int_to_ptr.vmem [resolvable:$true] %s16
      %19 = dma.hbm_to_vmem [thread:$0]  %s0, 32, %s17, [#allocation3]
    $region5: #{tpu_custom_call.1} parent=1 // pred_fallthru
      _
    // Predicated region
    $region6: #{tpu_custom_call.1} parent=1 // pred_check
      _
    $region7: #{tpu_custom_call.1} parent=1 // pred_check_branch
      %21 = sbr.rel (0) target = $region9
    $region8: #{tpu_custom_call.1} parent=1 // pred_region
      %s23 = ssub.s32 32, 32
      %24 = vsyncadd [#allocation6], %s23
      %s26 = sshll.u32 [#allocation5], 4
      %s27 = int_to_ptr.vmem [resolvable:$true] %s26
      %29 = dma.hbm_to_vmem [thread:$0]  %s1, 32, %s27, [#allocation6]
    $region9: #{tpu_custom_call.1} parent=1 // pred_fallthru
      _
    // Predicated region
    $region10: #{tpu_custom_call.1} parent=1 // pred_check
      _
    $region11: #{tpu_custom_call.1} parent=1 // pred_check_branch
      %31 = sbr.rel (0) target = $region13
    $region12: #{tpu_custom_call.1} parent=1 // pred_region
      %32 = dma.done [#allocation3], 32
    $region13: #{tpu_custom_call.1} parent=1 // pred_fallthru
      _
    // Predicated region
    $region14: #{tpu_custom_call.1} parent=1 // pred_check
      _
    $region15: #{tpu_custom_call.1} parent=1 // pred_check_branch
      %34 = sbr.rel (0) target = $region17
    $region16: #{tpu_custom_call.1} parent=1 // pred_region
      %35 = dma.done [#allocation6], 32
    $region17: #{tpu_custom_call.1} parent=1 // pred_fallthru
      _
    %v36 = vld [vmem:[#allocation2] sm:$0x3]
    %v37 = vld [vmem:[#allocation5] sm:$0x3]
    %v38 = vmul.f32 %v36, 0.5
    %v39 = vtanh.pop %v38
    %v40 = vadd.f32 %v39, 1.0
    %v41 = vmul.f32 %v40, 0.5
    %v42 = vmul.f32 %v37, 0.5
    %v43 = vtanh.pop %v42
    %v44 = vadd.f32 %v43, 1.0
    %v45 = vmul.f32 %v44, 0.5
    %v46 = vmax.f32 %v36, 0.0
    %v47 = vmul.f32 %v36, %v45
    %v48 = vsub.f32 %v46, %v47
    %vm49 = vcmp.ge.f32.partialorder %v36, 0.0
    %v50 = vsub.f32 1.0, %v41
    %v51 = vsel %vm49, %v41, %v50
    %v52 = vlog2.pop %v51
    %v53 = vmul.f32 %v52, 0.6931472
    %v54 = vsub.f32 %v48, %v53
    %v55 = vsub.f32 %v41, %v45
    %v56 = vand.u32 2147483647, %v55
    %v57 = vmul.f32 %v54, %v56
    %58 = vst [vmem:[#allocation7] sm:$0x3] %v57
    // Predicated region
    $region18: #{tpu_custom_call.1} parent=1 // pred_check
      _
    $region19: #{tpu_custom_call.1} parent=1 // pred_check_branch
      %60 = sbr.rel (0) target = $region21
    $region20: #{tpu_custom_call.1} parent=1 // pred_region
      %s62 = ssub.s32 32, 32
      %63 = vsyncadd [#allocation4], %s62
      %s65 = sshll.u32 [#allocation7], 4
      %s66 = int_to_ptr.vmem [resolvable:$true] %s65
      %68 = dma.vmem_to_hbm [thread:$0]  %s66, 32, %s2, [#allocation4]
    $region21: #{tpu_custom_call.1} parent=1 // pred_fallthru
      _
    // Predicated region
    $region22: #{tpu_custom_call.1} parent=1 // pred_check
      _
    $region23: #{tpu_custom_call.1} parent=1 // pred_check_branch
      %70 = sbr.rel (0) target = $region25
    $region24: #{tpu_custom_call.1} parent=1 // pred_region
      %71 = dma.done [#allocation4], 32
    $region25: #{tpu_custom_call.1} parent=1 // pred_fallthru
      _
    %72 = vsyncpa [#allocation3], 1
    %73 = vsyncpa [#allocation6], 1
    %74 = vsyncpa [#allocation4], 1

</llo_original>
